<compile_context>
chip_gen: v6e
topology: v6e:2x2x1
jax: 0.10.0
libtpu: 0.0.40
codegen_flags: <defaults>
</compile_context>

<pallas_src>
import jax
import jax.numpy as jnp
from jax import lax
from jax.experimental import pallas as pl
from jax.experimental.pallas import tpu as pltpu


def _sigmoid_tanh(x):
    # sigmoid(x) == 0.5 * tanh(0.5 * x) + 0.5  -> single EUP transcendental,
    # mul/add go to the VPU which has slack in this kernel.
    return jnp.tanh(0.5 * x) * 0.5 + 0.5


def multitask_kernel(x_ref, wphi_ref, bphi_ref, whead_ref, bhead_ref, out_ref):
    # Shared trunk: (k, d) . (tn, d)^T -> (k, tn).  bf16 operands straight to
    # the MXU, f32 accumulation; batch stays on the lane axis.
    h = lax.dot_general(
        wphi_ref[...], x_ref[...],
        dimension_numbers=(((1,), (1,)), ((), ())),
        preferred_element_type=jnp.float32,
    )
    h = h + bphi_ref[...]                       # f32 bias add (VPU)
    s = _sigmoid_tanh(h)                        # (k, tn) f32, one EUP op/elem

    # Fused heads: (2, k) . (k, tn) -> (2, tn); row 0 = clf logit, row 1 = reg.
    z = jnp.dot(whead_ref[...], s, preferred_element_type=jnp.float32)
    z = z + bhead_ref[...]

    # Head sigmoid only on the classification row; both stores are lane-dense.
    out_ref[0:1, :] = _sigmoid_tanh(z[0:1, :]).astype(out_ref.dtype)
    out_ref[1:2, :] = z[1:2, :].astype(out_ref.dtype)


def multitask_forward(x, w_phi, b_phi, w_bin, b_bin, w_reg, b_reg,
                      *, tn=4096, compute_dtype=jnp.bfloat16):
    """PyTorch-native parameter shapes:
         w_phi: (k, d), b_phi: (k,)
         w_bin: (1, k), b_bin: (1,)
         w_reg: (1, k), b_reg: (1,)
       Returns (clf, reg), each (N, 1) float32 — matching the nn.Module outputs."""
    N, d = x.shape
    k = w_phi.shape[0]

    # Batch-block size: multiple of 128 lanes, no larger than (padded) N, and
    # capped so the grid keeps >= ~8 steps (dual-TC sharding on v7x + input
    # double buffering).  v5e/v6e (1 TC) are unaffected by the cap.
    steps_target = 8
    tn = max(128, (int(tn) // 128) * 128)
    tn = min(tn, pl.cdiv(N, 128) * 128)
    tn = min(tn, max(128, pl.cdiv(pl.cdiv(N, steps_target), 128) * 128))
    grid = (pl.cdiv(N, tn),)

    # Low-precision streaming operands (dominant HBM traffic halved).
    x_lp = x.astype(compute_dtype)                                # (N, d) bf16
    w_phi_lp = w_phi.astype(compute_dtype)                        # (k, d) bf16
    b_phi2 = b_phi.reshape(k, 1).astype(jnp.float32)              # (k, 1) f32
    # Fuse both heads into one (2, k) weight / (2, 1) bias (kept f32: tiny).
    w_head = jnp.concatenate([w_bin, w_reg], axis=0).astype(jnp.float32)       # (2, k)
    b_head = jnp.stack([b_bin.reshape(()), b_reg.reshape(())]).reshape(2, 1)
    b_head = b_head.astype(jnp.float32)                                        # (2, 1)

    itemsize_lp = jnp.dtype(compute_dtype).itemsize
    out = pl.pallas_call(
        multitask_kernel,
        out_shape=jax.ShapeDtypeStruct((2, N), jnp.float32),
        grid_spec=pltpu.PrefetchScalarGridSpec(
            num_scalar_prefetch=0,
            grid=grid,
            in_specs=[
                pl.BlockSpec((tn, d), lambda i: (i, 0)),   # x block, pipelined over N
                pl.BlockSpec((k, d), lambda i: (0, 0)),    # W_phi   (resident)
                pl.BlockSpec((k, 1), lambda i: (0, 0)),    # b_phi   (resident)
                pl.BlockSpec((2, k), lambda i: (0, 0)),    # fused head weight
                pl.BlockSpec((2, 1), lambda i: (0, 0)),    # fused head bias
            ],
            out_specs=pl.BlockSpec((2, tn), lambda i: (0, i)),   # lane-dense slab
        ),
        compiler_params=pltpu.CompilerParams(
            dimension_semantics=("parallel",),             # dual-TC sharding on v7x
        ),
        cost_estimate=pl.CostEstimate(
            flops=2 * N * k * (d + 2),
            transcendentals=N * (k + 1),                   # trunk tanh + clf-row tanh
            bytes_accessed=(itemsize_lp * (N * d + k * d)  # bf16 x + W_phi
                            + 4 * (2 * N + k + 2 * k + 2)),
        ),
    )(x_lp, w_phi_lp, b_phi2, w_head, b_head)

    clf = out[0, :].reshape(N, 1)
    reg = out[1, :].reshape(N, 1)
    return clf, reg


def init_params(key, d, k):
    """Deterministic synthetic parameters with PyTorch-native nn.Linear shapes."""
    k1, k2, k3, k4, k5, k6 = jax.random.split(key, 6)
    lim_phi = 1.0 / jnp.sqrt(jnp.float32(d))
    lim_head = 1.0 / jnp.sqrt(jnp.float32(k))
    w_phi = jax.random.uniform(k1, (k, d), jnp.float32, -lim_phi, lim_phi)
    b_phi = jax.random.uniform(k2, (k,), jnp.float32, -lim_phi, lim_phi)
    w_bin = jax.random.uniform(k3, (1, k), jnp.float32, -lim_head, lim_head)
    b_bin = jax.random.uniform(k4, (1,), jnp.float32, -lim_head, lim_head)
    w_reg = jax.random.uniform(k5, (1, k), jnp.float32, -lim_head, lim_head)
    b_reg = jax.random.uniform(k6, (1,), jnp.float32, -lim_head, lim_head)
    return w_phi, b_phi, w_bin, b_bin, w_reg, b_reg


def reference_forward(x, w_phi, b_phi, w_bin, b_bin, w_reg, b_reg,
                      *, trunk_dtype=jnp.float32):
    h = jnp.dot(x.astype(trunk_dtype), w_phi.astype(trunk_dtype).T,
                preferred_element_type=jnp.float32) + b_phi
    s = jax.nn.sigmoid(h)
    clf = jax.nn.sigmoid(s @ w_bin.T + b_bin)
    reg = s @ w_reg.T + b_reg
    return clf, reg


# TODO(synk): training loop / metric helpers (train, predict, accuracy, f1, ...)
# are host-side utilities, not part of the forward pass, and are not kernelized.

if __name__ == "__main__":
    # Small shapes consistent with the module: batch N, input dim d, hidden k.
    # N is deliberately NOT a multiple of 128 to exercise the ragged last block
    # (Pallas masks its out-of-range stores), and the tn cap gives a multi-step
    # grid (auto double-buffered x stream).
    N, d, k = 300, 32, 16

    key = jax.random.PRNGKey(0)
    kx, kp = jax.random.split(key)
    x = jax.random.normal(kx, (N, d), jnp.float32)
    params = init_params(kp, d, k)

    clf, reg = multitask_forward(x, *params)
    clf = jax.block_until_ready(clf)
    reg = jax.block_until_ready(reg)
    assert clf.shape == (N, 1) and reg.shape == (N, 1)

    # Tight check: reference evaluated with the same bf16-rounded trunk operands.
    clf_lp, reg_lp = reference_forward(x, *params, trunk_dtype=jnp.bfloat16)
    assert jnp.allclose(clf, clf_lp, atol=2e-3, rtol=2e-3), float(
        jnp.max(jnp.abs(clf - clf_lp)))
    assert jnp.allclose(reg, reg_lp, atol=2e-3, rtol=2e-3), float(
        jnp.max(jnp.abs(reg - reg_lp)))

    # Loose sanity check vs exact f32 module semantics (bounds the bf16 streaming error).
    clf_f32, reg_f32 = reference_forward(x, *params, trunk_dtype=jnp.float32)
    assert jnp.allclose(clf, clf_f32, atol=2e-2, rtol=2e-2), float(
        jnp.max(jnp.abs(clf - clf_f32)))
    assert jnp.allclose(reg, reg_f32, atol=2e-2, rtol=2e-2), float(
        jnp.max(jnp.abs(reg - reg_f32)))

    print("KERNEL_OK")
</pallas_src>

<mosaic_0001>
module attributes {stable_mosaic.version = 11 : i64} {
  func.func @multitask_kernel(%arg0: i32, %arg1: memref<128x32xbf16, #tpu.memory_space<vmem>>, %arg2: memref<16x32xbf16, #tpu.memory_space<vmem>>, %arg3: memref<16x1xf32, #tpu.memory_space<vmem>>, %arg4: memref<2x16xf32, #tpu.memory_space<vmem>>, %arg5: memref<2x1xf32, #tpu.memory_space<vmem>>, %arg6: memref<2x128xf32, #tpu.memory_space<vmem>>) attributes {dimension_semantics = [#tpu.dimension_semantics<parallel>], iteration_bounds = array<i64: 3>, scalar_prefetch = 0 : i64, scratch_operands = 0 : i64, tpu.core_type = #tpu.core_type<tc>, window_params = [{transform_indices = @transform_0, window_bounds = array<i64: 128, 32>}, {pipeline_mode = #tpu.pipeline_mode<synchronous>, transform_indices = @transform_1, window_bounds = array<i64: 16, 32>}, {pipeline_mode = #tpu.pipeline_mode<synchronous>, transform_indices = @transform_2, window_bounds = array<i64: 16, 1>}, {pipeline_mode = #tpu.pipeline_mode<synchronous>, transform_indices = @transform_3, window_bounds = array<i64: 2, 16>}, {pipeline_mode = #tpu.pipeline_mode<synchronous>, transform_indices = @transform_4, window_bounds = array<i64: 2, 1>}, {transform_indices = @transform_5, window_bounds = array<i64: 2, 128>}]} {
    %c0 = arith.constant 0 : index
    %c0_0 = arith.constant 0 : index
    %0 = vector.load %arg2[%c0, %c0_0] : memref<16x32xbf16, #tpu.memory_space<vmem>>, vector<16x32xbf16>
    %c0_1 = arith.constant 0 : index
    %c0_2 = arith.constant 0 : index
    %1 = vector.load %arg1[%c0_1, %c0_2] : memref<128x32xbf16, #tpu.memory_space<vmem>>, vector<128x32xbf16>
    %cst = arith.constant dense<0.000000e+00> : vector<16x128xf32>
    %2 = tpu.matmul %0, %1, %cst {dimension_numbers = #tpu.dot_dimension_numbers<[1], [1], [0], [0], [0, 0, 1, 0], [], []>} : vector<16x32xbf16>, vector<128x32xbf16>, vector<16x128xf32> -> vector<16x128xf32>
    %c0_3 = arith.constant 0 : index
    %c0_4 = arith.constant 0 : index
    %3 = vector.load %arg3[%c0_3, %c0_4] : memref<16x1xf32, #tpu.memory_space<vmem>>, vector<16x1xf32>
    %4 = vector.broadcast %3 : vector<16x1xf32> to vector<16x128xf32>
    %5 = arith.addf %2, %4 : vector<16x128xf32>
    %cst_5 = arith.constant 5.000000e-01 : f32
    %6 = vector.broadcast %cst_5 : f32 to vector<16x128xf32>
    %7 = arith.mulf %6, %5 : vector<16x128xf32>
    %8 = math.tanh %7 : vector<16x128xf32>
    %cst_6 = arith.constant 5.000000e-01 : f32
    %9 = vector.broadcast %cst_6 : f32 to vector<16x128xf32>
    %10 = arith.mulf %8, %9 : vector<16x128xf32>
    %cst_7 = arith.constant 5.000000e-01 : f32
    %11 = vector.broadcast %cst_7 : f32 to vector<16x128xf32>
    %12 = arith.addf %10, %11 : vector<16x128xf32>
    %c0_8 = arith.constant 0 : index
    %c0_9 = arith.constant 0 : index
    %13 = vector.load %arg4[%c0_8, %c0_9] : memref<2x16xf32, #tpu.memory_space<vmem>>, vector<2x16xf32>
    %cst_10 = arith.constant dense<0.000000e+00> : vector<2x128xf32>
    %14 = tpu.matmul %13, %12, %cst_10 {dimension_numbers = #tpu.dot_dimension_numbers<[1], [0], [0], [1], [0, 0, 1, 1], [], []>} : vector<2x16xf32>, vector<16x128xf32>, vector<2x128xf32> -> vector<2x128xf32>
    %c0_11 = arith.constant 0 : index
    %c0_12 = arith.constant 0 : index
    %15 = vector.load %arg5[%c0_11, %c0_12] : memref<2x1xf32, #tpu.memory_space<vmem>>, vector<2x1xf32>
    %16 = vector.broadcast %15 : vector<2x1xf32> to vector<2x128xf32>
    %17 = arith.addf %14, %16 : vector<2x128xf32>
    %18 = vector.extract_strided_slice %17 {offsets = [0, 0], sizes = [1, 128], strides = [1, 1]} : vector<2x128xf32> to vector<1x128xf32>
    %cst_13 = arith.constant 5.000000e-01 : f32
    %19 = vector.broadcast %cst_13 : f32 to vector<1x128xf32>
    %20 = arith.mulf %19, %18 : vector<1x128xf32>
    %21 = math.tanh %20 : vector<1x128xf32>
    %cst_14 = arith.constant 5.000000e-01 : f32
    %22 = vector.broadcast %cst_14 : f32 to vector<1x128xf32>
    %23 = arith.mulf %21, %22 : vector<1x128xf32>
    %cst_15 = arith.constant 5.000000e-01 : f32
    %24 = vector.broadcast %cst_15 : f32 to vector<1x128xf32>
    %25 = arith.addf %23, %24 : vector<1x128xf32>
    %c0_16 = arith.constant 0 : index
    %c0_17 = arith.constant 0 : index
    %26 = vector.load %arg6[%c0_16, %c0_17] : memref<2x128xf32, #tpu.memory_space<vmem>>, vector<1x128xf32>
    tpu.vector_store %arg6[%c0_16, %c0_17], %25 {strides = array<i32>} : memref<2x128xf32, #tpu.memory_space<vmem>>, vector<1x128xf32>,
    %27 = vector.extract_strided_slice %17 {offsets = [1, 0], sizes = [1, 128], strides = [1, 1]} : vector<2x128xf32> to vector<1x128xf32>
    %c1 = arith.constant 1 : index
    %c0_18 = arith.constant 0 : index
    %28 = vector.load %arg6[%c1, %c0_18] : memref<2x128xf32, #tpu.memory_space<vmem>>, vector<1x128xf32>
    tpu.vector_store %arg6[%c1, %c0_18], %27 {strides = array<i32>} : memref<2x128xf32, #tpu.memory_space<vmem>>, vector<1x128xf32>,
    return
  }
  func.func @transform_0(%arg0: i32) -> (i32, i32) {
    %c0_i32 = arith.constant 0 : i32
    %c0_i32_0 = arith.constant 0 : i32
    return %arg0, %c0_i32 : i32, i32
  }
  func.func @transform_1(%arg0: i32) -> (i32, i32) {
    %c0_i32 = arith.constant 0 : i32
    %c0_i32_0 = arith.constant 0 : i32
    %c0_i32_1 = arith.constant 0 : i32
    return %c0_i32, %c0_i32_0 : i32, i32
  }
  func.func @transform_2(%arg0: i32) -> (i32, i32) {
    %c0_i32 = arith.constant 0 : i32
    %c0_i32_0 = arith.constant 0 : i32
    %c0_i32_1 = arith.constant 0 : i32
    return %c0_i32, %c0_i32_0 : i32, i32
  }
  func.func @transform_3(%arg0: i32) -> (i32, i32) {
    %c0_i32 = arith.constant 0 : i32
    %c0_i32_0 = arith.constant 0 : i32
    %c0_i32_1 = arith.constant 0 : i32
    return %c0_i32, %c0_i32_0 : i32, i32
  }
  func.func @transform_4(%arg0: i32) -> (i32, i32) {
    %c0_i32 = arith.constant 0 : i32
    %c0_i32_0 = arith.constant 0 : i32
    %c0_i32_1 = arith.constant 0 : i32
    return %c0_i32, %c0_i32_0 : i32, i32
  }
  func.func @transform_5(%arg0: i32) -> (i32, i32) {
    %c0_i32 = arith.constant 0 : i32
    %c0_i32_0 = arith.constant 0 : i32
    return %c0_i32, %arg0 : i32, i32
  }
}

</mosaic_0001>

<llo_original>
// kernel: tpu_custom_call.1
$region0: #{tpu_custom_call.1}
  #allocation0 [shape = 'u32[]', space=smem, size = 0x4, offset = 0x4, fixed_abs, tag = 'smem constant byte address 0x4 - core index']
  #allocation1 [shape = 'u32[144,128]{1,0:T(1,128)}', space=vmem, size = 0x12000, scoped, tag = 'internal scratch']
  %s0 = inlined_call_operand.vmem [shape: bf16[300,32], index: 0, kind: input, shape index: {}]
  %s1 = inlined_call_operand.vmem [shape: bf16[16,32], index: 1, kind: input, shape index: {}]
  %s2 = inlined_call_operand.vmem [shape: f32[16,1], index: 2, kind: input, shape index: {}]
  %s3 = inlined_call_operand.vmem [shape: f32[2,16], index: 3, kind: input, shape index: {}]
  %s4 = inlined_call_operand.vmem [shape: f32[2,1], index: 4, kind: input, shape index: {}]
  %s5 = inlined_call_operand.hbm [shape: f32[2,300], index: 5, kind: output, shape index: {}]
  %s6 = sld [smem:[#allocation0]]
  $region53: #{tpu_custom_call.1} parent=0
    _
  %s8 = ssub.s32 1, %s6
  %s9 = scalar_select 0, %s8, %s6
  $region1: #{tpu_custom_call.1} parent=0
    #allocation2 [shape = 'u8[2048]{0}', space=vmem, size = 0x800, scoped, tag = 'output window, operand 0']
    #allocation3 [shape = 's32[2]{0}', space=sflag, size = 0x8, scoped, tag = 'scoped memory for tpu_custom_call.1']
    %10 = vsyncpa [#allocation3], 0
    %s11 = scalar_lea.sflag [#allocation3], 1
    %12 = vsyncpa %s11, 0
    loop: start=0, step=1, limit=5
    $region2: #{tpu_custom_call.1} parent=1 // loop_pre_header
      _
    $region3: #{tpu_custom_call.1} parent=1 // loop_header
      %s14 = sphi 0, %s18
      %p15 = scmp.ge.s32.totalorder %s14, 5
      %s24 = sphi 0, %s26
      %s27 = sphi 0, %s24
      %s28 = sphi 0, %s27
      %s44 = sphi 0, %s28
      %s48 = sphi 0, %s48
      %s50 = sphi 0, %s48
      %s51 = sphi 0, %s50
      %s65 = sphi 0, %s51
      %s69 = sphi 0, %s69
      %s71 = sphi 0, %s69
      %s72 = sphi 0, %s71
      %s86 = sphi 0, %s72
      %s90 = sphi 0, %s90
      %s92 = sphi 0, %s90
      %s93 = sphi 0, %s92
      %s107 = sphi 0, %s93
      %s111 = sphi 0, %s111
      %s113 = sphi 0, %s111
      %s114 = sphi 0, %s113
      %s128 = sphi 0, %s114
      %s134 = sphi 0, %s136
      %s137 = sphi 0, %s134
      %s138 = sphi 0, %s137
      %s154 = sphi 0, %s138
    $region4: #{tpu_custom_call.1} parent=1 // loop_header_branch
      %17 = sbr.rel (%p15) target = $region8
    $region5: #{tpu_custom_call.1} parent=1 // loop_body
      %s19 = ssub.s32 %s14, 1
      %s20 = ssub.s32 %s14, 2
      %s21 = sadd.s32 %s14, 1
      %s22 = ssub.s32 %s14, %s21
      %p23 = scmp.eq.s32.totalorder %s22, 0
      %s25 = sadd.s32 %s24, 1
      %s26 = scalar_select %p23, %s24, %s25
      %p29 = pneg %p23
      %p30 = scmp.eq.s32.totalorder %s14, 2
      %p31 = por %p29, %p30
      %p32 = scmp.ne.s32.totalorder %s24, %s27
      %p33 = scmp.eq.s32.totalorder %s14, 0
      %p34 = por %p32, %p33
      %p35 = scmp.ne.s32.totalorder %s24, %s27
      %p36 = scmp.eq.s32.totalorder %s19, 2
      %p37 = por %p35, %p36
      %p38 = scmp.ne.s32.totalorder %s27, %s28
      %p39 = scmp.eq.s32.totalorder %s19, 0
      %p40 = por %p38, %p39
      %p41 = scmp.ne.s32.totalorder %s27, %s28
      %p42 = scmp.eq.s32.totalorder %s20, 2
      %p43 = por %p41, %p42
      %p45 = scmp.ne.s32.totalorder %s28, %s44
      %p46 = scmp.eq.s32.totalorder %s20, 0
      %p47 = por %p45, %p46
      %s49 = sadd.s32 %s48, 1
      %p52 = scmp.eq.s32.totalorder %s14, 2
      %p53 = scmp.ne.s32.totalorder %s48, %s50
      %p54 = scmp.eq.s32.totalorder %s14, 0
      %p55 = por %p53, %p54
      %p56 = scmp.ne.s32.totalorder %s48, %s50
      %p57 = scmp.eq.s32.totalorder %s19, 2
      %p58 = por %p56, %p57
      %p59 = scmp.ne.s32.totalorder %s50, %s51
      %p60 = scmp.eq.s32.totalorder %s19, 0
      %p61 = por %p59, %p60
      %p62 = scmp.ne.s32.totalorder %s50, %s51
      %p63 = scmp.eq.s32.totalorder %s20, 2
      %p64 = por %p62, %p63
      %p66 = scmp.ne.s32.totalorder %s51, %s65
      %p67 = scmp.eq.s32.totalorder %s20, 0
      %p68 = por %p66, %p67
      %s70 = sadd.s32 %s69, 1
      %p73 = scmp.eq.s32.totalorder %s14, 2
      %p74 = scmp.ne.s32.totalorder %s69, %s71
      %p75 = scmp.eq.s32.totalorder %s14, 0
      %p76 = por %p74, %p75
      %p77 = scmp.ne.s32.totalorder %s69, %s71
      %p78 = scmp.eq.s32.totalorder %s19, 2
      %p79 = por %p77, %p78
      %p80 = scmp.ne.s32.totalorder %s71, %s72
      %p81 = scmp.eq.s32.totalorder %s19, 0
      %p82 = por %p80, %p81
      %p83 = scmp.ne.s32.totalorder %s71, %s72
      %p84 = scmp.eq.s32.totalorder %s20, 2
      %p85 = por %p83, %p84
      %p87 = scmp.ne.s32.totalorder %s72, %s86
      %p88 = scmp.eq.s32.totalorder %s20, 0
      %p89 = por %p87, %p88
      %s91 = sadd.s32 %s90, 1
      %p94 = scmp.eq.s32.totalorder %s14, 2
      %p95 = scmp.ne.s32.totalorder %s90, %s92
      %p96 = scmp.eq.s32.totalorder %s14, 0
      %p97 = por %p95, %p96
      %p98 = scmp.ne.s32.totalorder %s90, %s92
      %p99 = scmp.eq.s32.totalorder %s19, 2
      %p100 = por %p98, %p99
      %p101 = scmp.ne.s32.totalorder %s92, %s93
      %p102 = scmp.eq.s32.totalorder %s19, 0
      %p103 = por %p101, %p102
      %p104 = scmp.ne.s32.totalorder %s92, %s93
      %p105 = scmp.eq.s32.totalorder %s20, 2
      %p106 = por %p104, %p105
      %p108 = scmp.ne.s32.totalorder %s93, %s107
      %p109 = scmp.eq.s32.totalorder %s20, 0
      %p110 = por %p108, %p109
      %s112 = sadd.s32 %s111, 1
      %p115 = scmp.eq.s32.totalorder %s14, 2
      %p116 = scmp.ne.s32.totalorder %s111, %s113
      %p117 = scmp.eq.s32.totalorder %s14, 0
      %p118 = por %p116, %p117
      %p119 = scmp.ne.s32.totalorder %s111, %s113
      %p120 = scmp.eq.s32.totalorder %s19, 2
      %p121 = por %p119, %p120
      %p122 = scmp.ne.s32.totalorder %s113, %s114
      %p123 = scmp.eq.s32.totalorder %s19, 0
      %p124 = por %p122, %p123
      %p125 = scmp.ne.s32.totalorder %s113, %s114
      %p126 = scmp.eq.s32.totalorder %s20, 2
      %p127 = por %p125, %p126
      %p129 = scmp.ne.s32.totalorder %s114, %s128
      %p130 = scmp.eq.s32.totalorder %s20, 0
      %p131 = por %p129, %p130
      %s132 = ssub.s32 %s14, %s21
      %p133 = scmp.eq.s32.totalorder %s132, 0
      %s135 = sadd.s32 %s134, 1
      %s136 = scalar_select %p133, %s134, %s135
      %p139 = pneg %p133
      %p140 = scmp.eq.s32.totalorder %s14, 2
      %p141 = por %p139, %p140
      %p142 = scmp.ne.s32.totalorder %s134, %s137
      %p143 = scmp.eq.s32.totalorder %s14, 0
      %p144 = por %p142, %p143
      %p145 = scmp.ne.s32.totalorder %s134, %s137
      %p146 = scmp.eq.s32.totalorder %s19, 2
      %p147 = por %p145, %p146
      %p148 = scmp.ne.s32.totalorder %s137, %s138
      %p149 = scmp.eq.s32.totalorder %s19, 0
      %p150 = por %p148, %p149
      %p151 = scmp.ne.s32.totalorder %s137, %s138
      %p152 = scmp.eq.s32.totalorder %s20, 2
      %p153 = por %p151, %p152
      %p155 = scmp.ne.s32.totalorder %s138, %s154
      %p156 = scmp.eq.s32.totalorder %s20, 0
      %p157 = por %p155, %p156
      %p158 = scmp.le.s32.totalorder 1, %s14
      %p159 = scmp.lt.s32.totalorder %s14, 4
      %p160 = pnand %p158, %p159
      %p161 = pneg %p160
      // Predicated region
      $region9: #{tpu_custom_call.1} parent=5 // pred_check
        _
      $region10: #{tpu_custom_call.1} parent=5 // pred_check_branch
        %163 = sbr.rel (%p160) target = $region12
      $region11: #{tpu_custom_call.1} parent=5 // pred_region
        %s164 = ssub.s32 %s14, 1
        // Predicated region
        $region13: #{tpu_custom_call.1} parent=11 // pred_check
          %p165 = pneg %p61
        $region14: #{tpu_custom_call.1} parent=11 // pred_check_branch
          %167 = sbr.rel (%p165) target = $region16
        $region15: #{tpu_custom_call.1} parent=11 // pred_region
          _
        $region16: #{tpu_custom_call.1} parent=11 // pred_fallthru
          _
        // Predicated region
        $region17: #{tpu_custom_call.1} parent=11 // pred_check
          %p168 = pneg %p82
        $region18: #{tpu_custom_call.1} parent=11 // pred_check_branch
          %170 = sbr.rel (%p168) target = $region20
        $region19: #{tpu_custom_call.1} parent=11 // pred_region
          _
        $region20: #{tpu_custom_call.1} parent=11 // pred_fallthru
          _
        // Predicated region
        $region21: #{tpu_custom_call.1} parent=11 // pred_check
          %p171 = pneg %p103
        $region22: #{tpu_custom_call.1} parent=11 // pred_check_branch
          %173 = sbr.rel (%p171) target = $region24
        $region23: #{tpu_custom_call.1} parent=11 // pred_region
          _
        $region24: #{tpu_custom_call.1} parent=11 // pred_fallthru
          _
        // Predicated region
        $region25: #{tpu_custom_call.1} parent=11 // pred_check
          %p174 = pneg %p124
        $region26: #{tpu_custom_call.1} parent=11 // pred_check_branch
          %176 = sbr.rel (%p174) target = $region28
        $region27: #{tpu_custom_call.1} parent=11 // pred_region
          _
        $region28: #{tpu_custom_call.1} parent=11 // pred_fallthru
          _
      $region12: #{tpu_custom_call.1} parent=5 // pred_fallthru
        _
      %p177 = scmp.lt.s32.totalorder %s14, 3
      // Predicated region
      $region29: #{tpu_custom_call.1} parent=5 // pred_check
        %p178 = pneg %p177
      $region30: #{tpu_custom_call.1} parent=5 // pred_check_branch
        %180 = sbr.rel (%p178) target = $region32
      $region31: #{tpu_custom_call.1} parent=5 // pred_region
        // Predicated region
        $region33: #{tpu_custom_call.1} parent=31 // pred_check
          %p181 = pneg %p34
        $region34: #{tpu_custom_call.1} parent=31 // pred_check_branch
          %183 = sbr.rel (%p181) target = $region36
        $region35: #{tpu_custom_call.1} parent=31 // pred_region
          %s184 = smul.u32 16, %s14
          %s185 = ssub.s32 38, %s184
          %p186 = scmp.lt.s32.totalorder %s185, 16
          %s187 = scalar_select %p186, %s185, 16
          %s188 = smul.u32 64, %s187
          %p189 = scmp.lt.s32.totalorder %s184, 37
          %s190 = scalar_select %p189, %s184, 37
          %s191 = smul.addr %s190, 4
          %s192 = scalar_lea.vmem %s0, %s191
          %s193 = smul.u32 16, %s14
          %s194 = ssub.s32 38, %s193
          %p195 = scmp.lt.s32.totalorder %s194, 16
          %s196 = scalar_select %p195, %s194, 16
          %s197 = smul.u32 64, %s196
        $region36: #{tpu_custom_call.1} parent=31 // pred_fallthru
          _
      $region32: #{tpu_custom_call.1} parent=5 // pred_fallthru
        _
      %p198 = scmp.le.s32.totalorder 1, %s14
      %p199 = scmp.lt.s32.totalorder %s14, 4
      %p200 = pnand %p198, %p199
      %p201 = pneg %p200
      // Predicated region
      $region37: #{tpu_custom_call.1} parent=5 // pred_check
        _
      $region38: #{tpu_custom_call.1} parent=5 // pred_check_branch
        %203 = sbr.rel (%p200) target = $region40
      $region39: #{tpu_custom_call.1} parent=5 // pred_region
        %s204 = ssub.s32 %s14, 1
        %s205 = smul.u32 16, %s19
        %s206 = ssub.s32 38, %s205
        %p207 = scmp.lt.s32.totalorder %s206, 16
        %s208 = scalar_select %p207, %s206, 16
        %s209 = smul.u32 64, %s208
        %p210 = scmp.lt.s32.totalorder %s205, 37
        %s211 = scalar_select %p210, %s205, 37
        %s212 = smul.addr %s211, 4
        %s213 = scalar_lea.vmem %s0, %s212
        %p214 = pneg %p40
        %p215 = pneg %p37
        %p216 = pneg %p61
        %p217 = pneg %p58
        %p218 = pneg %p82
        %p219 = pneg %p79
        %p220 = pneg %p103
        %p221 = pneg %p100
        %p222 = pneg %p124
        %p223 = pneg %p121
        %p224 = pneg %p150
        %p225 = pneg %p147
        %s226 = sand.u32 %s137, 1
        %s227 = scalar_lea.sflag [#allocation3], %s226
        %s228 = sand.u32 %s137, 1
        %s229 = smul.addr %s228, 2
        %s230 = scalar_lea.vmem [#allocation2], %s229
        %s231 = smul.u32 16, %s19
        %s232 = ssub.s32 38, %s231
        %p233 = scmp.lt.s32.totalorder %s232, 16
        %s234 = scalar_select %p233, %s232, 16
        %s235 = smul.u32 64, %s234
        %p236 = scmp.lt.s32.totalorder %s231, 37
        %s237 = scalar_select %p236, %s231, 37
        %s238 = smul.addr %s237, 4
        %s239 = scalar_lea.vmem %s0, %s238
        %s240 = smul.u32 16, %s19
        %s241 = ssub.s32 38, %s240
        %p242 = scmp.lt.s32.totalorder %s241, 16
        %s243 = scalar_select %p242, %s241, 16
        %s244 = smul.u32 64, %s243
        %v246 = vld [vmem:[%s1] sm:$0xf]
        %v247 = vld [vmem:[%s1 + $0x4] sm:$0xf]
        %v248 = vld [vmem:[%s239] sm:$0xf]
        %v249 = vld [vmem:[%s239 + $0x4] sm:$0xf]
        %v250 = vld [vmem:[%s239 + $0x8] sm:$0xf]
        %v251 = vld [vmem:[%s239 + $0xc] sm:$0xf]
        %v252 = vld [vmem:[%s239 + $0x10] sm:$0xf]
        %v253 = vld [vmem:[%s239 + $0x14] sm:$0xf]
        %v254 = vld [vmem:[%s239 + $0x18] sm:$0xf]
        %v255 = vld [vmem:[%s239 + $0x1c] sm:$0xf]
        %v256 = vld [vmem:[%s239 + $0x20] sm:$0xf]
        %v257 = vld [vmem:[%s239 + $0x24] sm:$0xf]
        %v258 = vld [vmem:[%s239 + $0x28] sm:$0xf]
        %v259 = vld [vmem:[%s239 + $0x2c] sm:$0xf]
        %v260 = vld [vmem:[%s239 + $0x30] sm:$0xf]
        %v261 = vld [vmem:[%s239 + $0x34] sm:$0xf]
        %v262 = vld [vmem:[%s239 + $0x38] sm:$0xf]
        %v263 = vld [vmem:[%s239 + $0x3c] sm:$0xf]
        %v264 = vld [vmem:[%s2] sm:$0xff]
        %v265 = vld [vmem:[%s2 + $0x8] sm:$0xff]
        %267 = vset.pattern.permute.xlu0 0
        %268 = vperm.xlu0 %267, %v264
        %v269 = vpop.permute.xlu0 %268
        %272 = vset.pattern.permute.xlu0 0
        %273 = vperm.xlu0 %272, %v265
        %v274 = vpop.permute.xlu0 %273
        %v278 = vunpack.c.l.b16 %v246
        %v279 = vunpack.c.l.b16 %v247
        %v280 = vpack.c.b16 %v279, %v278
        %v297 = vunpack.c.l.b16 %v248
        %v298 = vunpack.c.l.b16 %v249
        %v299 = vunpack.c.l.b16 %v250
        %v300 = vunpack.c.l.b16 %v251
        %v301 = vunpack.c.l.b16 %v252
        %v302 = vunpack.c.l.b16 %v253
        %v303 = vunpack.c.l.b16 %v254
        %v304 = vunpack.c.l.b16 %v255
        %v305 = vunpack.c.l.b16 %v256
        %v306 = vunpack.c.l.b16 %v257
        %v307 = vunpack.c.l.b16 %v258
        %v308 = vunpack.c.l.b16 %v259
        %v309 = vunpack.c.l.b16 %v260
        %v310 = vunpack.c.l.b16 %v261
        %v311 = vunpack.c.l.b16 %v262
        %v312 = vunpack.c.l.b16 %v263
        %v313 = vpack.c.b16 %v298, %v297
        %v314 = vpack.c.b16 %v300, %v299
        %v315 = vpack.c.b16 %v302, %v301
        %v316 = vpack.c.b16 %v304, %v303
        %v317 = vpack.c.b16 %v306, %v305
        %v318 = vpack.c.b16 %v308, %v307
        %v319 = vpack.c.b16 %v310, %v309
        %v320 = vpack.c.b16 %v312, %v311
        %vm321 = vcmask 261120
        %v323 = vsel %vm321, %v280, 0
        %v326 = vsel %vm321, %v313, 0
        %v329 = vsel %vm321, %v314, 0
        %v332 = vsel %vm321, %v315, 0
        %v335 = vsel %vm321, %v316, 0
        %v338 = vsel %vm321, %v317, 0
        %v341 = vsel %vm321, %v318, 0
        %v344 = vsel %vm321, %v319, 0
        %v347 = vsel %vm321, %v320, 0
        %349 = vmatprep.subr.bf16.mxu0 0
        %350 = vmatpush1.bf16.xpose.msra.mxu0 %v347
        %351 = vmatprep.subr.bf16.mxu0 0
        %352 = vmatpush1.bf16.xpose.msra.mxu0 %v344
        %353 = vmatprep.subr.bf16.mxu0 0
        %354 = vmatpush1.bf16.xpose.msra.mxu0 %v341
        %355 = vmatprep.subr.bf16.mxu0 0
        %356 = vmatpush1.bf16.xpose.msra.mxu0 %v338
        %357 = vmatprep.subr.bf16.mxu0 0
        %358 = vmatpush1.bf16.xpose.msra.mxu0 %v335
        %359 = vmatprep.subr.bf16.mxu0 0
        %360 = vmatpush1.bf16.xpose.msra.mxu0 %v332
        %361 = vmatprep.subr.bf16.mxu0 0
        %362 = vmatpush1.bf16.xpose.msra.mxu0 %v329
        %363 = vmatprep.subr.bf16.mxu0 0
        %364 = vmatpush1.bf16.xpose.msra.mxu0 %v326
        %365 = vmatprep.subr.bf16.mxu0 0
        %366 = vmatpush2.bf16.xpose.msra.mxu0 0
        %367 = vmatprep.subr.bf16.mxu0 0
        %368 = vmatpush2.bf16.xpose.msra.mxu0 0
        %369 = vmatprep.subr.bf16.mxu0 0
        %370 = vmatpush2.bf16.xpose.msra.mxu0 0
        %371 = vmatprep.subr.bf16.mxu0 0
        %372 = vmatpush2.bf16.xpose.msra.mxu0 0
        %373 = vmatprep.subr.bf16.mxu0 0
        %374 = vmatpush2.bf16.xpose.msra.mxu0 0
        %375 = vmatprep.subr.bf16.mxu0 0
        %376 = vmatpush2.bf16.xpose.msra.mxu0 0
        %377 = vmatprep.subr.bf16.mxu0 0
        %378 = vmatpush2.bf16.xpose.msra.mxu0 0
        %379 = vmatprep.subr.bf16.mxu0 0
        %380 = vmatpush2.bf16.xpose.msra.mxu0 0
        %381 = vmatprep.mubr.bf16.mxu0 0
        %382 = vmatmul.mubr.bf16.gmra.mxu0 %v323
        %v383 = vpop.f32.mrf.mxu0
        %v384 = vadd.f32 %v269, %v383
        %v385 = vpop.f32.mrf.mxu0
        %v386 = vpop.f32.mrf.mxu0
        %v387 = vadd.f32 %v274, %v386
        %v388 = vpop.f32.mrf.mxu0
        %389 = vdwg.mxu0
        %v390 = vmul.f32 %v384, 0.5
        %v391 = vmul.f32 %v387, 0.5
        %v392 = vtanh.pop %v390
        %v393 = vtanh.pop %v391
        %v394 = vmul.f32 %v392, 0.5
        %v395 = vmul.f32 %v393, 0.5
        %v396 = vadd.f32 %v394, 0.5
        %v397 = vadd.f32 %v395, 0.5
        %v398 = vld [vmem:[%s3] sm:$0x3]
        %v399 = vld [vmem:[%s4] sm:$0x3]
        %401 = vset.pattern.permute.xlu0 0
        %402 = vperm.xlu0 %401, %v399
        %v403 = vpop.permute.xlu0 %402
        %vm405 = vcmask 130048
        %v407 = vsel %vm405, %v398, 0
        %409 = vmatprep.subr.mxu0 0.0
        %410 = vmatpush1.msra.mxu0 0.0
        %411 = vmatprep.subr.mxu0 0.0
        %412 = vmatpush1.msra.mxu0 0.0
        %413 = vmatprep.subr.mxu0 0.0
        %414 = vmatpush1.msra.mxu0 0.0
        %415 = vmatprep.subr.mxu0 0.0
        %416 = vmatpush1.msra.mxu0 0.0
        %417 = vmatprep.subr.mxu0 0.0
        %418 = vmatpush1.msra.mxu0 0.0
        %419 = vmatprep.subr.mxu0 0.0
        %420 = vmatpush1.msra.mxu0 0.0
        %421 = vmatprep.subr.mxu0 0.0
        %422 = vmatpush1.msra.mxu0 0.0
        %423 = vmatprep.subr.mxu0 0.0
        %424 = vmatpush1.msra.mxu0 0.0
        %425 = vmatprep.subr.mxu0 0.0
        %426 = vmatpush1.msra.mxu0 0.0
        %427 = vmatprep.subr.mxu0 0.0
        %428 = vmatpush1.msra.mxu0 0.0
        %429 = vmatprep.subr.mxu0 0.0
        %430 = vmatpush1.msra.mxu0 0.0
        %431 = vmatprep.subr.mxu0 0.0
        %432 = vmatpush1.msra.mxu0 0.0
        %433 = vmatprep.subr.mxu0 0.0
        %434 = vmatpush1.msra.mxu0 0.0
        %435 = vmatprep.subr.mxu0 0.0
        %436 = vmatpush1.msra.mxu0 0.0
        %437 = vmatprep.subr.mxu0 0.0
        %438 = vmatpush1.msra.mxu0 %v397
        %439 = vmatprep.subr.mxu0 0.0
        %440 = vmatpush1.msra.mxu0 %v396
        %441 = vmatprep.subr.mxu0 0.0
        %442 = vmatpush2.msra.mxu0 0.0
        %443 = vmatprep.subr.mxu0 0.0
        %444 = vmatpush2.msra.mxu0 0.0
        %445 = vmatprep.subr.mxu0 0.0
        %446 = vmatpush2.msra.mxu0 0.0
        %447 = vmatprep.subr.mxu0 0.0
        %448 = vmatpush2.msra.mxu0 0.0
        %449 = vmatprep.subr.mxu0 0.0
        %450 = vmatpush2.msra.mxu0 0.0
        %451 = vmatprep.subr.mxu0 0.0
        %452 = vmatpush2.msra.mxu0 0.0
        %453 = vmatprep.subr.mxu0 0.0
        %454 = vmatpush2.msra.mxu0 0.0
        %455 = vmatprep.subr.mxu0 0.0
        %456 = vmatpush2.msra.mxu0 0.0
        %457 = vmatprep.subr.mxu0 0.0
        %458 = vmatpush2.msra.mxu0 0.0
        %459 = vmatprep.subr.mxu0 0.0
        %460 = vmatpush2.msra.mxu0 0.0
        %461 = vmatprep.subr.mxu0 0.0
        %462 = vmatpush2.msra.mxu0 0.0
        %463 = vmatprep.subr.mxu0 0.0
        %464 = vmatpush2.msra.mxu0 0.0
        %465 = vmatprep.subr.mxu0 0.0
        %466 = vmatpush2.msra.mxu0 0.0
        %467 = vmatprep.subr.mxu0 0.0
        %468 = vmatpush2.msra.mxu0 0.0
        %469 = vmatprep.subr.mxu0 0.0
        %470 = vmatpush2.msra.mxu0 0.0
        %471 = vmatprep.subr.mxu0 0.0
        %472 = vmatpush2.msra.mxu0 0.0
        %473 = vmatprep.mubr.f32.mxu0 0.0
        %474 = vmatmul.mubr.f32.gmra.mxu0 %v407
        %v475 = vpop.f32.mrf.mxu0
        %v476 = vadd.f32 %v403, %v475
        %v477 = vpop.f32.mrf.mxu0
        %478 = vdwg.mxu0
        %v479 = vmul.f32 %v476, 0.5
        %v480 = vtanh.pop %v479
        %v481 = vmul.f32 %v480, 0.5
        %v482 = vadd.f32 %v481, 0.5
        %483 = vst [vmem:[%s230] sm:$0x1] %v482
        %484 = vst [vmem:[%s230] sm:$0x2] %v476
        %s485 = sand.u32 %s137, 1
        %s486 = scalar_lea.sflag [#allocation3], %s485
        %s487 = sand.u32 %s137, 1
        %s488 = smul.addr %s487, 2
        %s489 = scalar_lea.vmem [#allocation2], %s488
        // Predicated region
        $region41: #{tpu_custom_call.1} parent=39 // pred_check
          %p490 = pneg %p147
        $region42: #{tpu_custom_call.1} parent=39 // pred_check_branch
          %492 = sbr.rel (%p490) target = $region44
        $region43: #{tpu_custom_call.1} parent=39 // pred_region
          %s494 = ssub.s32 32, 32
          %495 = vsyncadd %s486, %s494
          %s496 = smul.addr %s19, 32
          %s497 = scalar_lea.hbm %s5, %s496
          %s499 = sshll.u32 %s489, 4
          %s500 = int_to_ptr.vmem [resolvable:$true] %s499
          %502 = dma.vmem_to_hbm [thread:$0]  %s500, 32, %s497, %s486
        $region44: #{tpu_custom_call.1} parent=39 // pred_fallthru
          _
      $region40: #{tpu_custom_call.1} parent=5 // pred_fallthru
        _
      %p503 = scmp.le.s32.totalorder 2, %s14
      // Predicated region
      $region45: #{tpu_custom_call.1} parent=5 // pred_check
        %p504 = pneg %p503
      $region46: #{tpu_custom_call.1} parent=5 // pred_check_branch
        %506 = sbr.rel (%p504) target = $region48
      $region47: #{tpu_custom_call.1} parent=5 // pred_region
        %s507 = ssub.s32 %s14, 2
        // Predicated region
        $region49: #{tpu_custom_call.1} parent=47 // pred_check
          %p508 = pneg %p153
        $region50: #{tpu_custom_call.1} parent=47 // pred_check_branch
          %510 = sbr.rel (%p508) target = $region52
        $region51: #{tpu_custom_call.1} parent=47 // pred_region
          %s511 = sand.u32 %s138, 1
          %s512 = scalar_lea.sflag [#allocation3], %s511
          %s513 = sand.u32 %s138, 1
          %s514 = smul.addr %s513, 2
          %s515 = scalar_lea.vmem [#allocation2], %s514
          %516 = dma.done %s512, 32
        $region52: #{tpu_custom_call.1} parent=47 // pred_fallthru
          _
      $region48: #{tpu_custom_call.1} parent=5 // pred_fallthru
        _
    $region6: #{tpu_custom_call.1} parent=1 // loop_footer
      %s18 = sadd.s32 1, %s14
    $region7: #{tpu_custom_call.1} parent=1 // loop_footer_branch
      %13 = sbr.rel target = $region3
    $region8: #{tpu_custom_call.1} parent=1 // loop_exit
      _
    %517 = vsyncpa [#allocation3], 1
    %s518 = scalar_lea.sflag [#allocation3], 1
    %519 = vsyncpa %s518, 1

</llo_original>
